<compile_context>
chip_gen: v6e
topology: v6e:2x2x1
jax: 0.10.0
libtpu: 0.0.40
codegen_flags: <defaults>
</compile_context>

<pallas_src>
import jax
import jax.numpy as jnp
import numpy as np
from jax.experimental import pallas as pl
from jax.experimental.pallas import tpu as pltpu

_LANE = 128
_SUBLANE = 8
# ~6 MiB per tile buffer; with double-buffered input + output (~4 buffers)
# this stays well under v7x's 32 MiB default-scoped VMEM.
_TILE_BYTES_BUDGET = 6 * 1024 * 1024


def _copy_kernel(x_ref, o_ref):
    # BasicLR.forward: identity pass-through of the current tile.
    o_ref[...] = x_ref[...]


def basic_lr_forward(x, lr_weight=None, lr_bias=None, sigmoid=False):
    """Pallas implementation of BasicLR.forward (identity).

    lr_weight / lr_bias / sigmoid mirror the module's __init__ but are unused
    in forward(), exactly as in the PyTorch reference; they are never passed
    to the kernel.
    """
    del lr_weight, lr_bias, sigmoid  # unused in forward(), as in PyTorch

    orig_shape = x.shape
    n_elems = int(np.prod(orig_shape))
    last = orig_shape[-1]

    # Present a lane-dense 2-D view: last dim a multiple of 128 when possible
    # (avoids masked, partially-occupied lane stores on narrow feature dims).
    if last % _LANE != 0 and n_elems % _LANE == 0:
        x2 = x.reshape(n_elems // _LANE, _LANE)
    elif x.ndim == 2:
        x2 = x
    else:
        x2 = x.reshape(-1, last)

    R, C = x2.shape
    itemsize = jnp.dtype(x2.dtype).itemsize
    bytes_per_row = max(1, C * itemsize)

    # Row-tile size: as big as the VMEM budget allows (better HBM utilization),
    # rounded down to a sublane multiple; full extent if everything fits.
    tb = _TILE_BYTES_BUDGET // bytes_per_row
    if tb >= R:
        tb = R
    else:
        tb = max(_SUBLANE, (tb // _SUBLANE) * _SUBLANE)

    out2 = pl.pallas_call(
        _copy_kernel,
        out_shape=jax.ShapeDtypeStruct((R, C), x2.dtype),
        grid=(pl.cdiv(R, tb),),
        in_specs=[pl.BlockSpec((tb, C), lambda i: (i, 0))],
        out_specs=pl.BlockSpec((tb, C), lambda i: (i, 0)),
        # Identity op: let the output reuse the input buffer when donated.
        input_output_aliases={0: 0},
        compiler_params=pltpu.CompilerParams(
            dimension_semantics=("parallel",),  # shard row tiles across TCs (v7x)
            vmem_limit_bytes=32 * 1024 * 1024,
        ),
    )(x2)

    return out2.reshape(orig_shape)


if __name__ == "__main__":
    key = jax.random.PRNGKey(0)
    k_x, k_w, k_b = jax.random.split(key, 3)

    batch, input_dim = 8, 32

    # Example input.
    x = jax.random.normal(k_x, (batch, input_dim), dtype=jnp.float32)

    # Deterministic init of the module's (unused-in-forward) Linear(input_dim, 1).
    bound = 1.0 / (input_dim ** 0.5)
    lr_weight = jax.random.uniform(
        k_w, (1, input_dim), minval=-bound, maxval=bound, dtype=jnp.float32
    )
    lr_bias = jax.random.uniform(
        k_b, (1,), minval=-bound, maxval=bound, dtype=jnp.float32
    )

    # Snapshot to host BEFORE the call: with input_output_aliases the device
    # buffer may be reused in-place if the caller donates it.
    x_host = np.asarray(jax.device_get(x))

    out = basic_lr_forward(x, lr_weight, lr_bias, sigmoid=False)
    out = jax.block_until_ready(out)

    # Correctness check: forward is identity.
    out_host = np.asarray(jax.device_get(out))
    assert out_host.shape == x_host.shape and out_host.dtype == x_host.dtype
    assert np.array_equal(out_host, x_host)

    print("KERNEL_OK")
</pallas_src>

<mosaic_0001>
module attributes {stable_mosaic.version = 11 : i64} {
  func.func @_copy_kernel(%arg0: i32, %arg1: memref<2x128xf32, #tpu.memory_space<vmem>>, %arg2: memref<2x128xf32, #tpu.memory_space<vmem>>) attributes {dimension_semantics = [#tpu.dimension_semantics<parallel>], iteration_bounds = array<i64: 1>, scalar_prefetch = 0 : i64, scratch_operands = 0 : i64, tpu.core_type = #tpu.core_type<tc>, window_params = [{transform_indices = @transform_0, window_bounds = array<i64: 2, 128>}, {transform_indices = @transform_1, window_bounds = array<i64: 2, 128>}]} {
    %c0 = arith.constant 0 : index
    %c0_0 = arith.constant 0 : index
    %0 = vector.load %arg1[%c0, %c0_0] : memref<2x128xf32, #tpu.memory_space<vmem>>, vector<2x128xf32>
    %c0_1 = arith.constant 0 : index
    %c0_2 = arith.constant 0 : index
    %1 = vector.load %arg2[%c0_1, %c0_2] : memref<2x128xf32, #tpu.memory_space<vmem>>, vector<2x128xf32>
    tpu.vector_store %arg2[%c0_1, %c0_2], %0 {strides = array<i32>} : memref<2x128xf32, #tpu.memory_space<vmem>>, vector<2x128xf32>,
    return
  }
  func.func @transform_0(%arg0: i32) -> (i32, i32) {
    %c0_i32 = arith.constant 0 : i32
    %c0_i32_0 = arith.constant 0 : i32
    return %arg0, %c0_i32 : i32, i32
  }
  func.func @transform_1(%arg0: i32) -> (i32, i32) {
    %c0_i32 = arith.constant 0 : i32
    %c0_i32_0 = arith.constant 0 : i32
    return %arg0, %c0_i32 : i32, i32
  }
}

</mosaic_0001>

<llo_original>
// kernel: tpu_custom_call.1
$region0: #{tpu_custom_call.1}
  #allocation0 [shape = 'u32[]', space=smem, size = 0x4, offset = 0x4, fixed_abs, tag = 'smem constant byte address 0x4 - core index']
  #allocation1 [shape = 'u32[144,128]{1,0:T(1,128)}', space=vmem, size = 0x12000, scoped, tag = 'internal scratch']
  %s0 = inlined_call_operand.hbm [shape: f32[2,128], index: 0, kind: input, shape index: {}, may-alias: {0,1}]
  %s1 = inlined_call_operand.hbm [shape: f32[2,128], index: 1, kind: output, shape index: {}, may-alias: {0,1}]
  %s2 = sld [smem:[#allocation0]]
  $region18: #{tpu_custom_call.1} parent=0
    _
  %s4 = ssub.s32 1, %s2
  %s5 = scalar_select 0, %s4, %s2
  $region1: #{tpu_custom_call.1} parent=0
    #allocation2 [shape = 'u8[1024]{0}', space=vmem, size = 0x400, scoped, tag = 'input window, operand 0, single buffered']
    #allocation3 [shape = 's32[1]{0}', space=sflag, size = 0x4, scoped, tag = 'scoped memory for tpu_custom_call.1']
    #allocation4 [shape = 's32[1]{0}', space=sflag, size = 0x4, scoped, tag = 'scoped memory for tpu_custom_call.1']
    #allocation5 [shape = 'u8[1024]{0}', space=vmem, size = 0x400, scoped, tag = 'output window, operand 0, single buffered']
    %6 = vsyncpa [#allocation3], 0
    %7 = vsyncpa [#allocation4], 0
    // Predicated region
    $region2: #{tpu_custom_call.1} parent=1 // pred_check
      _
    $region3: #{tpu_custom_call.1} parent=1 // pred_check_branch
      %9 = sbr.rel (0) target = $region5
    $region4: #{tpu_custom_call.1} parent=1 // pred_region
      %s11 = ssub.s32 32, 32
      %12 = vsyncadd [#allocation3], %s11
      %s14 = sshll.u32 [#allocation2], 4
      %s15 = int_to_ptr.vmem [resolvable:$true] %s14
      %17 = dma.hbm_to_vmem [thread:$0]  %s0, 32, %s15, [#allocation3]
    $region5: #{tpu_custom_call.1} parent=1 // pred_fallthru
      _
    // Predicated region
    $region6: #{tpu_custom_call.1} parent=1 // pred_check
      _
    $region7: #{tpu_custom_call.1} parent=1 // pred_check_branch
      %19 = sbr.rel (0) target = $region9
    $region8: #{tpu_custom_call.1} parent=1 // pred_region
      %20 = dma.done [#allocation3], 32
    $region9: #{tpu_custom_call.1} parent=1 // pred_fallthru
      _
    %v21 = vld [vmem:[#allocation2] sm:$0x3]
    %22 = vst [vmem:[#allocation5] sm:$0x3] %v21
    // Predicated region
    $region10: #{tpu_custom_call.1} parent=1 // pred_check
      _
    $region11: #{tpu_custom_call.1} parent=1 // pred_check_branch
      %24 = sbr.rel (0) target = $region13
    $region12: #{tpu_custom_call.1} parent=1 // pred_region
      %s26 = ssub.s32 32, 32
      %27 = vsyncadd [#allocation4], %s26
      %s29 = sshll.u32 [#allocation5], 4
      %s30 = int_to_ptr.vmem [resolvable:$true] %s29
      %32 = dma.vmem_to_hbm [thread:$0]  %s30, 32, %s1, [#allocation4]
    $region13: #{tpu_custom_call.1} parent=1 // pred_fallthru
      _
    // Predicated region
    $region14: #{tpu_custom_call.1} parent=1 // pred_check
      _
    $region15: #{tpu_custom_call.1} parent=1 // pred_check_branch
      %34 = sbr.rel (0) target = $region17
    $region16: #{tpu_custom_call.1} parent=1 // pred_region
      %35 = dma.done [#allocation4], 32
    $region17: #{tpu_custom_call.1} parent=1 // pred_fallthru
      _
    %36 = vsyncpa [#allocation3], 1
    %37 = vsyncpa [#allocation4], 1

</llo_original>
